<compile_context>
chip_gen: v6e
topology: v6e:2x2x1
jax: 0.10.0
libtpu: 0.0.40
codegen_flags: <defaults>
</compile_context>

<pallas_src>
import functools

import jax
import jax.numpy as jnp
from jax.experimental import pallas as pl
from jax.experimental.pallas import tpu as pltpu


def _dice_partial_kernel(p_ref, t_ref, num_ref, den_ref, *,
                         l_valid, tile_l, k_per_shard):
    s = pl.program_id(0)          # feature-shard index (parallel)
    k = pl.program_id(1)          # feature-tile index within shard (reduction)

    @pl.when(k == 0)
    def _():
        num_ref[...] = jnp.zeros_like(num_ref)
        den_ref[...] = jnp.zeros_like(den_ref)

    p = p_ref[...].astype(jnp.float32)
    t = t_ref[...].astype(jnp.float32)

    # Mask lanes past the true feature extent.  Handles both the partial tail
    # tile (stale VMEM beyond the array) and fully-overhanging tiles of the
    # last shard (whose index_map was clamped).  Zero is sum-neutral for both
    # numerator and denominator.
    global_tile = s * k_per_shard + k
    col = global_tile * tile_l + jax.lax.broadcasted_iota(jnp.int32, p.shape, 1)
    valid = col < l_valid
    p = jnp.where(valid, p, 0.0)
    t = jnp.where(valid, t, 0.0)

    num_ref[...] += jnp.sum(p * t, axis=1, keepdims=True)[None]
    den_ref[...] += jnp.sum(p * p + t * t, axis=1, keepdims=True)[None]  # p=2


def binary_dice_loss(predict, target, smooth=1.0, p=2, reduction="mean",
                     tile_l=32768):
    assert p == 2, "kernel specialized to p=2 (module default)"
    assert predict.shape[0] == target.shape[0], \
        "predict & target batch size don't match"

    n = predict.shape[0]
    pred2d = predict.reshape(n, -1)
    targ2d = target.reshape(n, -1)
    l = pred2d.shape[1]

    # ---- fold features into sublanes when the batch is narrow (N < 8) -----
    fold = 1
    if n < 8:
        for cand in (8, 4, 2):
            if l % cand == 0:
                fold = cand
                break
    r = n * fold
    l_sub = l // fold
    if fold > 1:
        # free reshape: same contiguous row-major order, rows b*fold..b*fold+F-1
        # hold batch b's features
        pred2d = pred2d.reshape(r, l_sub)
        targ2d = targ2d.reshape(r, l_sub)

    # ---- tile the (folded) feature axis; budget double-buffered VMEM ------
    itemsize = pred2d.dtype.itemsize
    r_pad = ((r + 7) // 8) * 8                       # sublane padding of a tile
    budget = 12 * 1024 * 1024                        # < v5e 16 MiB scoped default
    max_tile = max(1, budget // (2 * 2 * r_pad * itemsize))  # 2 inputs x 2 bufs
    tile_budget = max(128, (min(tile_l, max_tile) // 128) * 128)
    # TODO(synk): for very large N (r_pad alone blowing the budget) the row
    # axis would also need tiling; not needed for typical dice-loss batches.
    if l_sub <= tile_budget:
        tile_l = l_sub            # single full-extent tile (always legal block)
    else:
        tile_l = tile_budget      # multiple of 128, partial tail tile is masked

    num_tiles = (l_sub + tile_l - 1) // tile_l
    num_shards = min(2, num_tiles)                   # lets both v7x TCs work
    k_per_shard = (num_tiles + num_shards - 1) // num_shards

    def in_map(s, k):
        # Clamp overhanging tiles of the last shard into range; the in-kernel
        # mask zeroes their contribution.
        return (0, jnp.minimum(s * k_per_shard + k, num_tiles - 1))

    num_out, den_out = pl.pallas_call(
        functools.partial(_dice_partial_kernel, l_valid=l_sub,
                          tile_l=tile_l, k_per_shard=k_per_shard),
        out_shape=(jax.ShapeDtypeStruct((num_shards, r, 1), jnp.float32),
                   jax.ShapeDtypeStruct((num_shards, r, 1), jnp.float32)),
        grid_spec=pltpu.PrefetchScalarGridSpec(
            num_scalar_prefetch=0,
            grid=(num_shards, k_per_shard),
            in_specs=[
                pl.BlockSpec((r, tile_l), in_map),
                pl.BlockSpec((r, tile_l), in_map),
            ],
            out_specs=[
                pl.BlockSpec((1, r, 1), lambda s, k: (s, 0, 0)),
                pl.BlockSpec((1, r, 1), lambda s, k: (s, 0, 0)),
            ],
        ),
        compiler_params=pltpu.CompilerParams(
            dimension_semantics=("parallel", "arbitrary")),
    )(pred2d, targ2d)

    # Combine shard partials and folded sub-rows (tiny: num_shards*r floats).
    num = num_out[:, :, 0].sum(axis=0).reshape(n, fold).sum(axis=1) + smooth
    den = den_out[:, :, 0].sum(axis=0).reshape(n, fold).sum(axis=1) + smooth
    loss = 1.0 - num / den

    if reduction == "mean":
        return jnp.mean(loss)
    elif reduction == "sum":
        return jnp.sum(loss)
    elif reduction == "none":
        return loss
    else:
        raise Exception("Unexpected reduction {}".format(reduction))


def _reference(predict, target, smooth=1.0):
    n = predict.shape[0]
    p2 = predict.reshape(n, -1).astype(jnp.float32)
    t2 = target.reshape(n, -1).astype(jnp.float32)
    num = jnp.sum(p2 * t2, axis=1) + smooth
    den = jnp.sum(p2 ** 2 + t2 ** 2, axis=1) + smooth
    return jnp.mean(1.0 - num / den)


if __name__ == "__main__":
    key = jax.random.PRNGKey(0)
    k1, k2, k3, k4 = jax.random.split(key, 4)

    # 1) main small NCHW case (single full-extent tile, fold=8)
    predict = jax.nn.sigmoid(jax.random.normal(k1, (2, 4, 16, 16), jnp.float32))
    target = (jax.random.uniform(k2, (2, 4, 16, 16)) > 0.5).astype(jnp.float32)
    loss = jax.block_until_ready(binary_dice_loss(predict, target))
    ref = _reference(predict, target)
    assert jnp.allclose(loss, ref, atol=2e-5, rtol=2e-5), (loss, ref)

    # 2) multi-tile + 2 shards + masked tail tile (tile_l forced small)
    predict2 = jax.nn.sigmoid(jax.random.normal(k3, (3, 4, 24, 24), jnp.float32))
    target2 = (jax.random.uniform(k4, (3, 4, 24, 24)) > 0.5).astype(jnp.float32)
    loss2 = jax.block_until_ready(
        binary_dice_loss(predict2, target2, tile_l=128))
    ref2 = _reference(predict2, target2)
    assert jnp.allclose(loss2, ref2, atol=2e-5, rtol=2e-5), (loss2, ref2)

    # 3) bf16 inputs kept bf16 at the kernel boundary (f32 accumulation inside)
    loss3 = jax.block_until_ready(
        binary_dice_loss(predict.astype(jnp.bfloat16),
                         target.astype(jnp.bfloat16)))
    ref3 = _reference(predict.astype(jnp.bfloat16),
                      target.astype(jnp.bfloat16))
    assert jnp.allclose(loss3, ref3, atol=2e-5, rtol=2e-5), (loss3, ref3)

    print("KERNEL_OK")
</pallas_src>

<mosaic_0001>
module attributes {stable_mosaic.version = 11 : i64} {
  func.func @_dice_partial_kernel(%arg0: i32, %arg1: i32, %arg2: memref<16x128xf32, #tpu.memory_space<vmem>>, %arg3: memref<16x128xf32, #tpu.memory_space<vmem>>, %arg4: memref<1x16x1xf32, #tpu.memory_space<vmem>>, %arg5: memref<1x16x1xf32, #tpu.memory_space<vmem>>) attributes {dimension_semantics = [#tpu.dimension_semantics<parallel>, #tpu.dimension_semantics<arbitrary>], iteration_bounds = array<i64: 1, 1>, scalar_prefetch = 0 : i64, scratch_operands = 0 : i64, tpu.core_type = #tpu.core_type<tc>, window_params = [{transform_indices = @transform_0, window_bounds = array<i64: 16, 128>}, {transform_indices = @transform_1, window_bounds = array<i64: 16, 128>}, {transform_indices = @transform_2, window_bounds = array<i64: 1, 16, 1>}, {transform_indices = @transform_3, window_bounds = array<i64: 1, 16, 1>}]} {
    %c0_i32 = arith.constant 0 : i32
    %0 = arith.cmpi eq, %arg1, %c0_i32 : i32
    %1 = arith.extui %0 : i1 to i32
    %c0_i32_0 = arith.constant 0 : i32
    %2 = arith.cmpi ne, %1, %c0_i32_0 : i32
    scf.if %2 {
      %cst_20 = arith.constant 0.000000e+00 : f32
      %33 = vector.broadcast %cst_20 : f32 to vector<1x16x1xf32>
      %c0_21 = arith.constant 0 : index
      %c0_22 = arith.constant 0 : index
      %c0_23 = arith.constant 0 : index
      %34 = vector.load %arg4[%c0_21, %c0_22, %c0_23] : memref<1x16x1xf32, #tpu.memory_space<vmem>>, vector<1x16x1xf32>
      tpu.vector_store %arg4[%c0_21, %c0_22, %c0_23], %33 {strides = array<i32>} : memref<1x16x1xf32, #tpu.memory_space<vmem>>, vector<1x16x1xf32>,
      %cst_24 = arith.constant 0.000000e+00 : f32
      %35 = vector.broadcast %cst_24 : f32 to vector<1x16x1xf32>
      %c0_25 = arith.constant 0 : index
      %c0_26 = arith.constant 0 : index
      %c0_27 = arith.constant 0 : index
      %36 = vector.load %arg5[%c0_25, %c0_26, %c0_27] : memref<1x16x1xf32, #tpu.memory_space<vmem>>, vector<1x16x1xf32>
      tpu.vector_store %arg5[%c0_25, %c0_26, %c0_27], %35 {strides = array<i32>} : memref<1x16x1xf32, #tpu.memory_space<vmem>>, vector<1x16x1xf32>,
    } else {
    }
    %c0 = arith.constant 0 : index
    %c0_1 = arith.constant 0 : index
    %3 = vector.load %arg2[%c0, %c0_1] : memref<16x128xf32, #tpu.memory_space<vmem>>, vector<16x128xf32>
    %c0_2 = arith.constant 0 : index
    %c0_3 = arith.constant 0 : index
    %4 = vector.load %arg3[%c0_2, %c0_3] : memref<16x128xf32, #tpu.memory_space<vmem>>, vector<16x128xf32>
    %c1_i32 = arith.constant 1 : i32
    %5 = arith.muli %arg0, %c1_i32 : i32
    %6 = arith.addi %5, %arg1 : i32
    %c128_i32 = arith.constant 128 : i32
    %7 = arith.muli %6, %c128_i32 : i32
    %8 = tpu.iota {dimensions = array<i32: 1>} : vector<16x128xi32>
    %9 = vector.broadcast %7 : i32 to vector<16x128xi32>
    %10 = arith.addi %9, %8 : vector<16x128xi32>
    %c128_i32_4 = arith.constant 128 : i32
    %11 = vector.broadcast %c128_i32_4 : i32 to vector<16x128xi32>
    %12 = arith.cmpi slt, %10, %11 : vector<16x128xi32>
    %cst = arith.constant 0.000000e+00 : f32
    %13 = vector.broadcast %cst : f32 to vector<16x128xf32>
    %14 = arith.select %12, %3, %13 : vector<16x128xi1>, vector<16x128xf32>
    %cst_5 = arith.constant 0.000000e+00 : f32
    %15 = vector.broadcast %cst_5 : f32 to vector<16x128xf32>
    %16 = arith.select %12, %4, %15 : vector<16x128xi1>, vector<16x128xf32>
    %c0_6 = arith.constant 0 : index
    %c0_7 = arith.constant 0 : index
    %c0_8 = arith.constant 0 : index
    %17 = vector.load %arg4[%c0_6, %c0_7, %c0_8] : memref<1x16x1xf32, #tpu.memory_space<vmem>>, vector<1x16x1xf32>
    %18 = arith.mulf %14, %16 : vector<16x128xf32>
    %cst_9 = arith.constant dense<0.000000e+00> : vector<16xf32>
    %19 = vector.multi_reduction <add>, %18, %cst_9 [1] : vector<16x128xf32> to vector<16xf32>
    %20 = vector.shape_cast %19 : vector<16xf32> to vector<16x1xf32>
    %21 = vector.shape_cast %20 : vector<16x1xf32> to vector<1x16x1xf32>
    %22 = arith.addf %17, %21 : vector<1x16x1xf32>
    %c0_10 = arith.constant 0 : index
    %c0_11 = arith.constant 0 : index
    %c0_12 = arith.constant 0 : index
    %23 = vector.load %arg4[%c0_10, %c0_11, %c0_12] : memref<1x16x1xf32, #tpu.memory_space<vmem>>, vector<1x16x1xf32>
    tpu.vector_store %arg4[%c0_10, %c0_11, %c0_12], %22 {strides = array<i32>} : memref<1x16x1xf32, #tpu.memory_space<vmem>>, vector<1x16x1xf32>,
    %c0_13 = arith.constant 0 : index
    %c0_14 = arith.constant 0 : index
    %c0_15 = arith.constant 0 : index
    %24 = vector.load %arg5[%c0_13, %c0_14, %c0_15] : memref<1x16x1xf32, #tpu.memory_space<vmem>>, vector<1x16x1xf32>
    %25 = arith.mulf %14, %14 : vector<16x128xf32>
    %26 = arith.mulf %16, %16 : vector<16x128xf32>
    %27 = arith.addf %25, %26 : vector<16x128xf32>
    %cst_16 = arith.constant dense<0.000000e+00> : vector<16xf32>
    %28 = vector.multi_reduction <add>, %27, %cst_16 [1] : vector<16x128xf32> to vector<16xf32>
    %29 = vector.shape_cast %28 : vector<16xf32> to vector<16x1xf32>
    %30 = vector.shape_cast %29 : vector<16x1xf32> to vector<1x16x1xf32>
    %31 = arith.addf %24, %30 : vector<1x16x1xf32>
    %c0_17 = arith.constant 0 : index
    %c0_18 = arith.constant 0 : index
    %c0_19 = arith.constant 0 : index
    %32 = vector.load %arg5[%c0_17, %c0_18, %c0_19] : memref<1x16x1xf32, #tpu.memory_space<vmem>>, vector<1x16x1xf32>
    tpu.vector_store %arg5[%c0_17, %c0_18, %c0_19], %31 {strides = array<i32>} : memref<1x16x1xf32, #tpu.memory_space<vmem>>, vector<1x16x1xf32>,
    return
  }
  func.func @transform_0(%arg0: i32, %arg1: i32) -> (i32, i32) {
    %c1_i32 = arith.constant 1 : i32
    %0 = arith.muli %arg0, %c1_i32 : i32
    %1 = arith.addi %0, %arg1 : i32
    %c0_i32 = arith.constant 0 : i32
    %2 = arith.minsi %1, %c0_i32 : i32
    %c0_i32_0 = arith.constant 0 : i32
    %c0_i32_1 = arith.constant 0 : i32
    return %c0_i32_0, %2 : i32, i32
  }
  func.func @transform_1(%arg0: i32, %arg1: i32) -> (i32, i32) {
    %c1_i32 = arith.constant 1 : i32
    %0 = arith.muli %arg0, %c1_i32 : i32
    %1 = arith.addi %0, %arg1 : i32
    %c0_i32 = arith.constant 0 : i32
    %2 = arith.minsi %1, %c0_i32 : i32
    %c0_i32_0 = arith.constant 0 : i32
    %c0_i32_1 = arith.constant 0 : i32
    return %c0_i32_0, %2 : i32, i32
  }
  func.func @transform_2(%arg0: i32, %arg1: i32) -> (i32, i32, i32) {
    %c0_i32 = arith.constant 0 : i32
    %c0_i32_0 = arith.constant 0 : i32
    %c0_i32_1 = arith.constant 0 : i32
    return %arg0, %c0_i32, %c0_i32_0 : i32, i32, i32
  }
  func.func @transform_3(%arg0: i32, %arg1: i32) -> (i32, i32, i32) {
    %c0_i32 = arith.constant 0 : i32
    %c0_i32_0 = arith.constant 0 : i32
    %c0_i32_1 = arith.constant 0 : i32
    return %arg0, %c0_i32, %c0_i32_0 : i32, i32, i32
  }
}

</mosaic_0001>

<llo_original>
// kernel: tpu_custom_call.1
$region0: #{tpu_custom_call.1}
  #allocation0 [shape = 'u32[]', space=smem, size = 0x4, offset = 0x4, fixed_abs, tag = 'smem constant byte address 0x4 - core index']
  #allocation1 [shape = 'u32[144,128]{1,0:T(1,128)}', space=vmem, size = 0x12000, scoped, tag = 'internal scratch']
  %s0 = inlined_call_operand.hbm [shape: f32[16,128], index: 0, kind: input, shape index: {}]
  %s1 = inlined_call_operand.hbm [shape: f32[16,128], index: 1, kind: input, shape index: {}]
  %s2 = inlined_call_operand.vmem [shape: f32[1,16,1], index: 2, kind: output, shape index: {0}]
  %s3 = inlined_call_operand.vmem [shape: f32[1,16,1], index: 3, kind: output, shape index: {1}]
  %4 = xla_tuple %s2, %s3
  %s5 = sld [smem:[#allocation0]]
  $region38: #{tpu_custom_call.1} parent=0
    _
  %s7 = ssub.s32 1, %s5
  %s8 = scalar_select 0, %s7, %s5
  $region1: #{tpu_custom_call.1} parent=0
    #allocation2 [shape = 'u8[8192]{0}', space=vmem, size = 0x2000, scoped, tag = 'input window, operand 0, single buffered']
    #allocation3 [shape = 's32[1]{0}', space=sflag, size = 0x4, scoped, tag = 'scoped memory for tpu_custom_call.1']
    #allocation4 [shape = 'u8[8192]{0}', space=vmem, size = 0x2000, scoped, tag = 'input window, operand 1, single buffered']
    #allocation5 [shape = 's32[1]{0}', space=sflag, size = 0x4, scoped, tag = 'scoped memory for tpu_custom_call.1']
    %9 = vsyncpa [#allocation3], 0
    %10 = vsyncpa [#allocation5], 0
    // Predicated region
    $region2: #{tpu_custom_call.1} parent=1 // pred_check
      _
    $region3: #{tpu_custom_call.1} parent=1 // pred_check_branch
      %12 = sbr.rel (0) target = $region5
    $region4: #{tpu_custom_call.1} parent=1 // pred_region
      %s13 = sadd.s32 0, 0
      %p14 = scmp.lt.s32.totalorder %s13, 0
      %s15 = scalar_select %p14, %s13, 0
      %s17 = ssub.s32 256, 256
      %18 = vsyncadd [#allocation3], %s17
      %s19 = smul.addr %s15, 128
      %s20 = scalar_lea.hbm %s0, %s19
      %s21 = sshll.u32 [#allocation2], 4
      %s22 = int_to_ptr.vmem [resolvable:$true] %s21
      %27 = dma.hbm_to_vmem [thread:$0]  %s20, 256, %s22, [#allocation3], 128, 128, 8
    $region5: #{tpu_custom_call.1} parent=1 // pred_fallthru
      _
    // Predicated region
    $region6: #{tpu_custom_call.1} parent=1 // pred_check
      _
    $region7: #{tpu_custom_call.1} parent=1 // pred_check_branch
      %29 = sbr.rel (0) target = $region9
    $region8: #{tpu_custom_call.1} parent=1 // pred_region
      %s30 = sadd.s32 0, 0
      %p31 = scmp.lt.s32.totalorder %s30, 0
      %s32 = scalar_select %p31, %s30, 0
      %s34 = ssub.s32 256, 256
      %35 = vsyncadd [#allocation5], %s34
      %s36 = smul.addr %s32, 128
      %s37 = scalar_lea.hbm %s1, %s36
      %s38 = sshll.u32 [#allocation4], 4
      %s39 = int_to_ptr.vmem [resolvable:$true] %s38
      %44 = dma.hbm_to_vmem [thread:$0]  %s37, 256, %s39, [#allocation5], 128, 128, 8
    $region9: #{tpu_custom_call.1} parent=1 // pred_fallthru
      _
    // Predicated region
    $region10: #{tpu_custom_call.1} parent=1 // pred_check
      _
    $region11: #{tpu_custom_call.1} parent=1 // pred_check_branch
      %46 = sbr.rel (0) target = $region13
    $region12: #{tpu_custom_call.1} parent=1 // pred_region
      %47 = dma.done [#allocation3], 256
    $region13: #{tpu_custom_call.1} parent=1 // pred_fallthru
      _
    // Predicated region
    $region14: #{tpu_custom_call.1} parent=1 // pred_check
      _
    $region15: #{tpu_custom_call.1} parent=1 // pred_check_branch
      %49 = sbr.rel (0) target = $region17
    $region16: #{tpu_custom_call.1} parent=1 // pred_region
      %50 = dma.done [#allocation5], 256
    $region17: #{tpu_custom_call.1} parent=1 // pred_fallthru
      _
    %s51 = sadd.s32 0, 0
    %p52 = scmp.lt.s32.totalorder %s51, 0
    %s53 = scalar_select %p52, %s51, 0
    %s54 = sadd.s32 0, 0
    %p55 = scmp.lt.s32.totalorder %s54, 0
    %s56 = scalar_select %p55, %s54, 0
    %p57 = scmp.eq.s32.totalorder 0, 0
    // Predicated region
    $region18: #{tpu_custom_call.1} parent=1 // pred_check
      %p58 = pneg %p57
    $region19: #{tpu_custom_call.1} parent=1 // pred_check_branch
      %60 = sbr.rel (%p58) target = $region21
    $region20: #{tpu_custom_call.1} parent=1 // pred_region
      %vm61 = vcmask 7168
      %62 = vst.msk [vmem:[%s2] sm:$0xff] %vm61, 0.0
      %63 = vst.msk [vmem:[%s2 + $0x8] sm:$0xff] %vm61, 0.0
      %64 = vst.msk [vmem:[%s3] sm:$0xff] %vm61, 0.0
      %65 = vst.msk [vmem:[%s3 + $0x8] sm:$0xff] %vm61, 0.0
    $region21: #{tpu_custom_call.1} parent=1 // pred_fallthru
      _
    %v66 = vld [vmem:[#allocation2] sm:$0xff]
    %v67 = vld [vmem:[#allocation2 + $0x8] sm:$0xff]
    %v68 = vld [vmem:[#allocation4] sm:$0xff]
    %v69 = vld [vmem:[#allocation4 + $0x8] sm:$0xff]
    %s70 = sadd.s32 0, 0
    %s71 = smul.u32 %s70, 128
    %v72 = vlaneseq
    %v73 = vand.u32 %v72, 127
    %v74 = vstv %s71
    %v75 = vadd.s32 %v74, %v73
    %vm76 = vcmp.lt.s32.totalorder %v75, 128
    %v77 = vsel %vm76, %v66, 0.0
    %v78 = vsel %vm76, %v67, 0.0
    %v79 = vsel %vm76, %v68, 0.0
    %v80 = vsel %vm76, %v69, 0.0
    %v81 = vld [vmem:[%s2] sm:$0xff]
    %v82 = vld [vmem:[%s2 + $0x8] sm:$0xff]
    %v83 = vmul.f32 %v77, %v79
    %v84 = vmul.f32 %v78, %v80
    %85 = vadd.xlane.f32.xlu0 %v83
    %v86 = vpop.xlane.xlu0 %85
    %87 = vadd.xlane.f32.xlu0 %v84
    %v88 = vpop.xlane.xlu0 %87
    %v89 = vadd.f32 %v81, %v86
    %v90 = vadd.f32 %v82, %v88
    %vm91 = vcmask 7168
    %92 = vst.msk [vmem:[%s2] sm:$0xff] %vm91, %v89
    %93 = vst.msk [vmem:[%s2 + $0x8] sm:$0xff] %vm91, %v90
    %v94 = vld [vmem:[%s3] sm:$0xff]
    %v95 = vld [vmem:[%s3 + $0x8] sm:$0xff]
    %v96 = vmul.f32 %v77, %v77
    %v97 = vmul.f32 %v78, %v78
    %v98 = vmul.f32 %v79, %v79
    %v99 = vmul.f32 %v80, %v80
    %v100 = vadd.f32 %v96, %v98
    %v101 = vadd.f32 %v97, %v99
    %102 = vadd.xlane.f32.xlu0 %v100
    %v103 = vpop.xlane.xlu0 %102
    %104 = vadd.xlane.f32.xlu0 %v101
    %v105 = vpop.xlane.xlu0 %104
    %v106 = vadd.f32 %v94, %v103
    %v107 = vadd.f32 %v95, %v105
    %108 = vst.msk [vmem:[%s3] sm:$0xff] %vm91, %v106
    %109 = vst.msk [vmem:[%s3 + $0x8] sm:$0xff] %vm91, %v107
    // Predicated region
    $region22: #{tpu_custom_call.1} parent=1 // pred_check
      _
    $region23: #{tpu_custom_call.1} parent=1 // pred_check_branch
      %111 = sbr.rel (0) target = $region25
    $region24: #{tpu_custom_call.1} parent=1 // pred_region
      _
    $region25: #{tpu_custom_call.1} parent=1 // pred_fallthru
      _
    // Predicated region
    $region26: #{tpu_custom_call.1} parent=1 // pred_check
      _
    $region27: #{tpu_custom_call.1} parent=1 // pred_check_branch
      %113 = sbr.rel (0) target = $region29
    $region28: #{tpu_custom_call.1} parent=1 // pred_region
      _
    $region29: #{tpu_custom_call.1} parent=1 // pred_fallthru
      _
    // Predicated region
    $region30: #{tpu_custom_call.1} parent=1 // pred_check
      _
    $region31: #{tpu_custom_call.1} parent=1 // pred_check_branch
      %115 = sbr.rel (0) target = $region33
    $region32: #{tpu_custom_call.1} parent=1 // pred_region
      _
    $region33: #{tpu_custom_call.1} parent=1 // pred_fallthru
      _
    // Predicated region
    $region34: #{tpu_custom_call.1} parent=1 // pred_check
      _
    $region35: #{tpu_custom_call.1} parent=1 // pred_check_branch
      %117 = sbr.rel (0) target = $region37
    $region36: #{tpu_custom_call.1} parent=1 // pred_region
      _
    $region37: #{tpu_custom_call.1} parent=1 // pred_fallthru
      _
    %118 = vsyncpa [#allocation3], 1
    %119 = vsyncpa [#allocation5], 1

</llo_original>
